<compile_context>
chip_gen: v7x
topology: tpu7x:2x2x1
jax: 0.10.0
libtpu: 0.0.40
codegen_flags: <defaults>
</compile_context>

<pallas_src>
import jax
import jax.numpy as jnp
from jax.experimental import pallas as pl
from jax.experimental.pallas import tpu as pltpu

IN_FEATURES = 784
H1 = 256
H2 = 256
NUM_CLASSES = 10
OUT_PAD = 128          # lane-dense fc3 output (unmasked stores)


def _round_up(x, m):
    return (x + m - 1) // m * m


def mlp_kernel(x_ref, w1_ref, b1_ref, w2_ref, b2_ref, w3_ref, b3_ref, o_ref):
    """One batch tile: 3 matmuls (bf16 in, f32 acc) + bias + leaky_relu(0.1)."""
    x = x_ref[...]                                             # (TB, 784) bf16

    # fc1 + leaky_relu(0.1)
    h = jnp.dot(x, w1_ref[...],
                preferred_element_type=jnp.float32) + b1_ref[...]
    h = jnp.maximum(h, 0.1 * h)

    # fc2 + leaky_relu(0.1)
    h = jnp.dot(h.astype(jnp.bfloat16), w2_ref[...],
                preferred_element_type=jnp.float32) + b2_ref[...]
    h = jnp.maximum(h, 0.1 * h)

    # fc3 (padded to 128 lanes; extra columns are zero-weight/zero-bias)
    out = jnp.dot(h.astype(jnp.bfloat16), w3_ref[...],
                  preferred_element_type=jnp.float32) + b3_ref[...]
    o_ref[...] = out.astype(o_ref.dtype)


def net_forward(x_nchw, kparams, *, block_batch=1024):
    """x_nchw: (B, 1, 28, 28) float32 -> logits (B, 10) float32."""
    w1, b1, w2, b2, w3, b3 = kparams
    B = x_nchw.shape[0]

    # Batch tile: multiple of 16 (bf16 sublane packing), capped at block_batch.
    TB = min(block_batch, _round_up(max(B, 16), 16))
    # Keep >=2 grid steps when the batch allows it so the "parallel" batch
    # axis can actually split across v7x's 2 TensorCores.
    if B >= 32 and _round_up(B, TB) // TB < 2:
        TB = _round_up(-(-B // 2), 16)
    B_pad = _round_up(B, TB)

    # Flatten + bf16 cast + batch pad fuse into a single XLA op (one HBM pass).
    x = x_nchw.reshape(B, IN_FEATURES).astype(jnp.bfloat16)
    x = jnp.pad(x, ((0, B_pad - B), (0, 0)))                   # (B_pad, 784)

    grid = (B_pad // TB,)

    flops = 2 * B_pad * (IN_FEATURES * H1 + H1 * H2 + H2 * OUT_PAD)
    bytes_accessed = (x.size * 2                               # bf16 input
                      + (w1.size + w2.size + w3.size) * 2      # bf16 weights
                      + (b1.size + b2.size + b3.size) * 4
                      + B_pad * OUT_PAD * 4)                   # f32 output

    out = pl.pallas_call(
        mlp_kernel,
        out_shape=jax.ShapeDtypeStruct((B_pad, OUT_PAD), jnp.float32),
        grid=grid,
        in_specs=[
            pl.BlockSpec((TB, IN_FEATURES), lambda i: (i, 0)),  # x: batch-tiled
            pl.BlockSpec((IN_FEATURES, H1), lambda i: (0, 0)),  # weights/biases:
            pl.BlockSpec((1, H1), lambda i: (0, 0)),            # constant block
            pl.BlockSpec((H1, H2), lambda i: (0, 0)),           # -> VMEM-resident
            pl.BlockSpec((1, H2), lambda i: (0, 0)),
            pl.BlockSpec((H2, OUT_PAD), lambda i: (0, 0)),
            pl.BlockSpec((1, OUT_PAD), lambda i: (0, 0)),
        ],
        out_specs=pl.BlockSpec((TB, OUT_PAD), lambda i: (i, 0)),
        compiler_params=pltpu.CompilerParams(
            dimension_semantics=("parallel",),                  # megacore on v7x
        ),
        cost_estimate=pl.CostEstimate(
            flops=flops, transcendentals=0, bytes_accessed=bytes_accessed),
    )(x, w1, b1, w2, b2, w3, b3)

    return out[:B, :NUM_CLASSES]


def init_params(key):
    """f32 master params matching nn.Linear's U(-1/sqrt(fan_in), 1/sqrt(fan_in)).

    Weights stored as (in, out) == PyTorch weight (out, in) transposed, so the
    kernel's x @ W + b equals PyTorch's x @ W.T + b.
    """
    dims = [(IN_FEATURES, H1), (H1, H2), (H2, NUM_CLASSES)]
    params = []
    keys = jax.random.split(key, 2 * len(dims))
    for idx, (fan_in, fan_out) in enumerate(dims):
        bound = 1.0 / jnp.sqrt(jnp.float32(fan_in))
        w = jax.random.uniform(keys[2 * idx], (fan_in, fan_out),
                               jnp.float32, -bound, bound)
        b = jax.random.uniform(keys[2 * idx + 1], (1, fan_out),
                               jnp.float32, -bound, bound)
        params += [w, b]
    return tuple(params)


def prepare_kernel_params(params):
    """Cast weights to bf16 and pad fc3 output dim to the lane-aligned width."""
    w1, b1, w2, b2, w3, b3 = params
    w1p = w1.astype(jnp.bfloat16)                                    # (784, 256)
    w2p = w2.astype(jnp.bfloat16)                                    # (256, 256)
    w3p = jnp.pad(w3, ((0, 0), (0, OUT_PAD - NUM_CLASSES))).astype(jnp.bfloat16)
    b3p = jnp.pad(b3, ((0, 0), (0, OUT_PAD - NUM_CLASSES)))
    return (w1p, b1, w2p, b2, w3p, b3p)


def reference_forward(x_nchw, kparams):
    """Pure-JAX reference with identical numerics (bf16 inputs, f32 accumulate)."""
    w1, b1, w2, b2, w3, b3 = kparams
    B = x_nchw.shape[0]
    x = x_nchw.reshape(B, -1).astype(jnp.bfloat16)

    def dot(a, w):
        return jnp.dot(a.astype(jnp.bfloat16), w,
                       preferred_element_type=jnp.float32)

    h = dot(x, w1) + b1
    h = jnp.maximum(h, 0.1 * h)
    h = dot(h, w2) + b2
    h = jnp.maximum(h, 0.1 * h)
    out = dot(h, w3) + b3
    return out[:, :NUM_CLASSES]


if __name__ == "__main__":
    key = jax.random.PRNGKey(0)
    k_params, k_x = jax.random.split(key)

    params = init_params(k_params)
    kparams = prepare_kernel_params(params)

    # MNIST-like input: batch=8, NCHW (8, 1, 28, 28)
    x = jax.random.normal(k_x, (8, 1, 28, 28), jnp.float32)

    logits = net_forward(x, kparams)
    logits = jax.block_until_ready(logits)

    ref = reference_forward(x, kparams)
    assert logits.shape == (8, NUM_CLASSES)
    assert jnp.allclose(logits, ref, atol=2e-3, rtol=2e-3), "mismatch vs reference"

    print("KERNEL_OK")
</pallas_src>

<mosaic_0001>
module attributes {stable_mosaic.version = 11 : i64} {
  func.func @mlp_kernel(%arg0: i32, %arg1: memref<16x784xbf16, #tpu.memory_space<vmem>>, %arg2: memref<784x256xbf16, #tpu.memory_space<vmem>>, %arg3: memref<1x256xf32, #tpu.memory_space<vmem>>, %arg4: memref<256x256xbf16, #tpu.memory_space<vmem>>, %arg5: memref<1x256xf32, #tpu.memory_space<vmem>>, %arg6: memref<256x128xbf16, #tpu.memory_space<vmem>>, %arg7: memref<1x128xf32, #tpu.memory_space<vmem>>, %arg8: memref<16x128xf32, #tpu.memory_space<vmem>>) attributes {dimension_semantics = [#tpu.dimension_semantics<parallel>], iteration_bounds = array<i64: 1>, scalar_prefetch = 0 : i64, scratch_operands = 0 : i64, tpu.core_type = #tpu.core_type<tc>, window_params = [{transform_indices = @transform_0, window_bounds = array<i64: 16, 784>}, {pipeline_mode = #tpu.pipeline_mode<synchronous>, transform_indices = @transform_1, window_bounds = array<i64: 784, 256>}, {pipeline_mode = #tpu.pipeline_mode<synchronous>, transform_indices = @transform_2, window_bounds = array<i64: 1, 256>}, {pipeline_mode = #tpu.pipeline_mode<synchronous>, transform_indices = @transform_3, window_bounds = array<i64: 256, 256>}, {pipeline_mode = #tpu.pipeline_mode<synchronous>, transform_indices = @transform_4, window_bounds = array<i64: 1, 256>}, {pipeline_mode = #tpu.pipeline_mode<synchronous>, transform_indices = @transform_5, window_bounds = array<i64: 256, 128>}, {pipeline_mode = #tpu.pipeline_mode<synchronous>, transform_indices = @transform_6, window_bounds = array<i64: 1, 128>}, {transform_indices = @transform_7, window_bounds = array<i64: 16, 128>}]} {
    %c0 = arith.constant 0 : index
    %c0_0 = arith.constant 0 : index
    %0 = vector.load %arg1[%c0, %c0_0] : memref<16x784xbf16, #tpu.memory_space<vmem>>, vector<16x784xbf16>
    %c0_1 = arith.constant 0 : index
    %c0_2 = arith.constant 0 : index
    %1 = vector.load %arg2[%c0_1, %c0_2] : memref<784x256xbf16, #tpu.memory_space<vmem>>, vector<784x256xbf16>
    %cst = arith.constant dense<0.000000e+00> : vector<16x256xf32>
    %2 = tpu.matmul %0, %1, %cst {dimension_numbers = #tpu.dot_dimension_numbers<[1], [0], [0], [1], [0, 0, 1, 1], [], []>} : vector<16x784xbf16>, vector<784x256xbf16>, vector<16x256xf32> -> vector<16x256xf32>
    %c0_3 = arith.constant 0 : index
    %c0_4 = arith.constant 0 : index
    %3 = vector.load %arg3[%c0_3, %c0_4] : memref<1x256xf32, #tpu.memory_space<vmem>>, vector<1x256xf32>
    %4 = vector.broadcast %3 : vector<1x256xf32> to vector<16x256xf32>
    %5 = arith.addf %2, %4 : vector<16x256xf32>
    %cst_5 = arith.constant 1.000000e-01 : f32
    %6 = vector.broadcast %cst_5 : f32 to vector<16x256xf32>
    %7 = arith.mulf %6, %5 : vector<16x256xf32>
    %8 = arith.maximumf %5, %7 : vector<16x256xf32>
    %9 = arith.truncf %8 : vector<16x256xf32> to vector<16x256xbf16>
    %c0_6 = arith.constant 0 : index
    %c0_7 = arith.constant 0 : index
    %10 = vector.load %arg4[%c0_6, %c0_7] : memref<256x256xbf16, #tpu.memory_space<vmem>>, vector<256x256xbf16>
    %cst_8 = arith.constant dense<0.000000e+00> : vector<16x256xf32>
    %11 = tpu.matmul %9, %10, %cst_8 {dimension_numbers = #tpu.dot_dimension_numbers<[1], [0], [0], [1], [0, 0, 1, 1], [], []>} : vector<16x256xbf16>, vector<256x256xbf16>, vector<16x256xf32> -> vector<16x256xf32>
    %c0_9 = arith.constant 0 : index
    %c0_10 = arith.constant 0 : index
    %12 = vector.load %arg5[%c0_9, %c0_10] : memref<1x256xf32, #tpu.memory_space<vmem>>, vector<1x256xf32>
    %13 = vector.broadcast %12 : vector<1x256xf32> to vector<16x256xf32>
    %14 = arith.addf %11, %13 : vector<16x256xf32>
    %cst_11 = arith.constant 1.000000e-01 : f32
    %15 = vector.broadcast %cst_11 : f32 to vector<16x256xf32>
    %16 = arith.mulf %15, %14 : vector<16x256xf32>
    %17 = arith.maximumf %14, %16 : vector<16x256xf32>
    %18 = arith.truncf %17 : vector<16x256xf32> to vector<16x256xbf16>
    %c0_12 = arith.constant 0 : index
    %c0_13 = arith.constant 0 : index
    %19 = vector.load %arg6[%c0_12, %c0_13] : memref<256x128xbf16, #tpu.memory_space<vmem>>, vector<256x128xbf16>
    %cst_14 = arith.constant dense<0.000000e+00> : vector<16x128xf32>
    %20 = tpu.matmul %18, %19, %cst_14 {dimension_numbers = #tpu.dot_dimension_numbers<[1], [0], [0], [1], [0, 0, 1, 1], [], []>} : vector<16x256xbf16>, vector<256x128xbf16>, vector<16x128xf32> -> vector<16x128xf32>
    %c0_15 = arith.constant 0 : index
    %c0_16 = arith.constant 0 : index
    %21 = vector.load %arg7[%c0_15, %c0_16] : memref<1x128xf32, #tpu.memory_space<vmem>>, vector<1x128xf32>
    %22 = vector.broadcast %21 : vector<1x128xf32> to vector<16x128xf32>
    %23 = arith.addf %20, %22 : vector<16x128xf32>
    %c0_17 = arith.constant 0 : index
    %c0_18 = arith.constant 0 : index
    %24 = vector.load %arg8[%c0_17, %c0_18] : memref<16x128xf32, #tpu.memory_space<vmem>>, vector<16x128xf32>
    tpu.vector_store %arg8[%c0_17, %c0_18], %23 {strides = array<i32>} : memref<16x128xf32, #tpu.memory_space<vmem>>, vector<16x128xf32>,
    return
  }
  func.func @transform_0(%arg0: i32) -> (i32, i32) {
    %c0_i32 = arith.constant 0 : i32
    %c0_i32_0 = arith.constant 0 : i32
    return %arg0, %c0_i32 : i32, i32
  }
  func.func @transform_1(%arg0: i32) -> (i32, i32) {
    %c0_i32 = arith.constant 0 : i32
    %c0_i32_0 = arith.constant 0 : i32
    %c0_i32_1 = arith.constant 0 : i32
    return %c0_i32, %c0_i32_0 : i32, i32
  }
  func.func @transform_2(%arg0: i32) -> (i32, i32) {
    %c0_i32 = arith.constant 0 : i32
    %c0_i32_0 = arith.constant 0 : i32
    %c0_i32_1 = arith.constant 0 : i32
    return %c0_i32, %c0_i32_0 : i32, i32
  }
  func.func @transform_3(%arg0: i32) -> (i32, i32) {
    %c0_i32 = arith.constant 0 : i32
    %c0_i32_0 = arith.constant 0 : i32
    %c0_i32_1 = arith.constant 0 : i32
    return %c0_i32, %c0_i32_0 : i32, i32
  }
  func.func @transform_4(%arg0: i32) -> (i32, i32) {
    %c0_i32 = arith.constant 0 : i32
    %c0_i32_0 = arith.constant 0 : i32
    %c0_i32_1 = arith.constant 0 : i32
    return %c0_i32, %c0_i32_0 : i32, i32
  }
  func.func @transform_5(%arg0: i32) -> (i32, i32) {
    %c0_i32 = arith.constant 0 : i32
    %c0_i32_0 = arith.constant 0 : i32
    %c0_i32_1 = arith.constant 0 : i32
    return %c0_i32, %c0_i32_0 : i32, i32
  }
  func.func @transform_6(%arg0: i32) -> (i32, i32) {
    %c0_i32 = arith.constant 0 : i32
    %c0_i32_0 = arith.constant 0 : i32
    %c0_i32_1 = arith.constant 0 : i32
    return %c0_i32, %c0_i32_0 : i32, i32
  }
  func.func @transform_7(%arg0: i32) -> (i32, i32) {
    %c0_i32 = arith.constant 0 : i32
    %c0_i32_0 = arith.constant 0 : i32
    return %arg0, %c0_i32 : i32, i32
  }
}

</mosaic_0001>

<llo_original>
// kernel: tpu_custom_call.1
$region0: #{tpu_custom_call.1}
  #allocation0 [shape = 'u32[]', space=smem, size = 0x4, offset = 0x4, fixed_abs, tag = 'smem constant byte address 0x4 - core index']
  #allocation1 [shape = 'u32[144,128]{1,0:T(1,128)}', space=vmem, size = 0x12000, scoped, tag = 'internal scratch']
  %s0 = inlined_call_operand.hbm [shape: bf16[16,784], index: 0, kind: input, shape index: {}]
  %s1 = inlined_call_operand.hbm [shape: bf16[784,256], index: 1, kind: input, shape index: {}]
  %s2 = inlined_call_operand.vmem [shape: f32[1,256], index: 2, kind: input, shape index: {}]
  %s3 = inlined_call_operand.hbm [shape: bf16[256,256], index: 3, kind: input, shape index: {}]
  %s4 = inlined_call_operand.vmem [shape: f32[1,256], index: 4, kind: input, shape index: {}]
  %s5 = inlined_call_operand.hbm [shape: bf16[256,128], index: 5, kind: input, shape index: {}]
  %s6 = inlined_call_operand.vmem [shape: f32[1,128], index: 6, kind: input, shape index: {}]
  %s7 = inlined_call_operand.hbm [shape: f32[16,128], index: 7, kind: output, shape index: {}]
  %s8 = sld [smem:[#allocation0]]
  $region54: #{tpu_custom_call.1} parent=0
    _
  %s10 = ssub.s32 1, %s8
  %s11 = scalar_select 0, %s10, %s8
  $region1: #{tpu_custom_call.1} parent=0
    #allocation2 [shape = 'u8[28672]{0}', space=vmem, size = 0x7000, scoped, tag = 'input window, operand 0, single buffered']
    #allocation3 [shape = 's32[1]{0}', space=sflag, size = 0x4, scoped, tag = 'scoped memory for tpu_custom_call.1']
    #allocation4 [shape = 's32[1]{0}', space=sflag, size = 0x4, scoped, tag = 'scoped memory for tpu_custom_call.1']
    #allocation5 [shape = 'u8[401408]{0}', space=vmem, size = 0x62000, scoped, tag = 'input window, operand 1, single buffered']
    #allocation6 [shape = 's32[1]{0}', space=sflag, size = 0x4, scoped, tag = 'scoped memory for tpu_custom_call.1']
    #allocation7 [shape = 'u8[131072]{0}', space=vmem, size = 0x20000, scoped, tag = 'input window, operand 3, single buffered']
    #allocation8 [shape = 'u8[65536]{0}', space=vmem, size = 0x10000, scoped, tag = 'input window, operand 5, single buffered']
    #allocation9 [shape = 's32[1]{0}', space=sflag, size = 0x4, scoped, tag = 'scoped memory for tpu_custom_call.1']
    #allocation10 [shape = 'u8[8192]{0}', space=vmem, size = 0x2000, scoped, tag = 'output window, operand 0, single buffered']
    %12 = vsyncpa [#allocation3], 0
    %13 = vsyncpa [#allocation6], 0
    %14 = vsyncpa [#allocation9], 0
    %15 = vsyncpa [#allocation4], 0
    // Predicated region
    $region2: #{tpu_custom_call.1} parent=1 // pred_check
      _
    $region3: #{tpu_custom_call.1} parent=1 // pred_check_branch
      %17 = sbr.rel (0) target = $region5
    $region4: #{tpu_custom_call.1} parent=1 // pred_region
      %s19 = ssub.s32 896, 896
      %20 = vsyncadd [#allocation3], %s19
      %s21 = sshll.u32 [#allocation2], 4
      %s22 = int_to_ptr.vmem [resolvable:$true] %s21
      %27 = dma.hbm_to_vmem [thread:$0]  %s0, 896, %s22, [#allocation3], 448, 448, 28
    $region5: #{tpu_custom_call.1} parent=1 // pred_fallthru
      _
    // Predicated region
    $region6: #{tpu_custom_call.1} parent=1 // pred_check
      _
    $region7: #{tpu_custom_call.1} parent=1 // pred_check_branch
      %29 = sbr.rel (0) target = $region9
    $region8: #{tpu_custom_call.1} parent=1 // pred_region
      %s31 = ssub.s32 12544, 12544
      %32 = vsyncadd [#allocation6], %s31
      %s33 = sshll.u32 [#allocation5], 4
      %s34 = int_to_ptr.vmem [resolvable:$true] %s33
      %39 = dma.hbm_to_vmem [thread:$0]  %s1, 12544, %s34, [#allocation6], 128, 128, 8
    $region9: #{tpu_custom_call.1} parent=1 // pred_fallthru
      _
    // Predicated region
    $region10: #{tpu_custom_call.1} parent=1 // pred_check
      _
    $region11: #{tpu_custom_call.1} parent=1 // pred_check_branch
      %41 = sbr.rel (0) target = $region13
    $region12: #{tpu_custom_call.1} parent=1 // pred_region
      _
    $region13: #{tpu_custom_call.1} parent=1 // pred_fallthru
      _
    // Predicated region
    $region14: #{tpu_custom_call.1} parent=1 // pred_check
      _
    $region15: #{tpu_custom_call.1} parent=1 // pred_check_branch
      %43 = sbr.rel (0) target = $region17
    $region16: #{tpu_custom_call.1} parent=1 // pred_region
      %s45 = ssub.s32 4096, 4096
      %46 = vsyncadd [#allocation6], %s45
      %s47 = sshll.u32 [#allocation7], 4
      %s48 = int_to_ptr.vmem [resolvable:$true] %s47
      %53 = dma.hbm_to_vmem [thread:$0]  %s3, 4096, %s48, [#allocation6], 128, 128, 8
    $region17: #{tpu_custom_call.1} parent=1 // pred_fallthru
      _
    // Predicated region
    $region18: #{tpu_custom_call.1} parent=1 // pred_check
      _
    $region19: #{tpu_custom_call.1} parent=1 // pred_check_branch
      %55 = sbr.rel (0) target = $region21
    $region20: #{tpu_custom_call.1} parent=1 // pred_region
      _
    $region21: #{tpu_custom_call.1} parent=1 // pred_fallthru
      _
    // Predicated region
    $region22: #{tpu_custom_call.1} parent=1 // pred_check
      _
    $region23: #{tpu_custom_call.1} parent=1 // pred_check_branch
      %57 = sbr.rel (0) target = $region25
    $region24: #{tpu_custom_call.1} parent=1 // pred_region
      %s59 = ssub.s32 2048, 2048
      %60 = vsyncadd [#allocation9], %s59
      %s61 = sshll.u32 [#allocation8], 4
      %s62 = int_to_ptr.vmem [resolvable:$true] %s61
      %67 = dma.hbm_to_vmem [thread:$0]  %s5, 2048, %s62, [#allocation9], 64, 64, 4
    $region25: #{tpu_custom_call.1} parent=1 // pred_fallthru
      _
    // Predicated region
    $region26: #{tpu_custom_call.1} parent=1 // pred_check
      _
    $region27: #{tpu_custom_call.1} parent=1 // pred_check_branch
      %69 = sbr.rel (0) target = $region29
    $region28: #{tpu_custom_call.1} parent=1 // pred_region
      _
    $region29: #{tpu_custom_call.1} parent=1 // pred_fallthru
      _
    // Predicated region
    $region30: #{tpu_custom_call.1} parent=1 // pred_check
      _
    $region31: #{tpu_custom_call.1} parent=1 // pred_check_branch
      %71 = sbr.rel (0) target = $region33
    $region32: #{tpu_custom_call.1} parent=1 // pred_region
      %72 = dma.done [#allocation3], 896
    $region33: #{tpu_custom_call.1} parent=1 // pred_fallthru
      _
    // Predicated region
    $region34: #{tpu_custom_call.1} parent=1 // pred_check
      _
    $region35: #{tpu_custom_call.1} parent=1 // pred_check_branch
      %74 = sbr.rel (0) target = $region37
    $region36: #{tpu_custom_call.1} parent=1 // pred_region
      %75 = dma.done [#allocation6], 12544
    $region37: #{tpu_custom_call.1} parent=1 // pred_fallthru
      _
    // Predicated region
    $region38: #{tpu_custom_call.1} parent=1 // pred_check
      _
    $region39: #{tpu_custom_call.1} parent=1 // pred_check_branch
      %77 = sbr.rel (0) target = $region41
    $region40: #{tpu_custom_call.1} parent=1 // pred_region
      %78 = dma.done [#allocation6], 4096
    $region41: #{tpu_custom_call.1} parent=1 // pred_fallthru
      _
    // Predicated region
    $region42: #{tpu_custom_call.1} parent=1 // pred_check
      _
    $region43: #{tpu_custom_call.1} parent=1 // pred_check_branch
      %80 = sbr.rel (0) target = $region45
    $region44: #{tpu_custom_call.1} parent=1 // pred_region
      %81 = dma.done [#allocation9], 2048
    $region45: #{tpu_custom_call.1} parent=1 // pred_fallthru
      _
    %v83 = vld [vmem:[#allocation2] sm:$0xff]
    %v84 = vld [vmem:[#allocation2 + $0x8] sm:$0xff]
    %v85 = vld [vmem:[#allocation2 + $0x10] sm:$0xff]
    %v86 = vld [vmem:[#allocation2 + $0x18] sm:$0xf]
    %v87 = vld [vmem:[#allocation2 + $0x1c] sm:$0xff]
    %v88 = vld [vmem:[#allocation2 + $0x24] sm:$0xff]
    %v89 = vld [vmem:[#allocation2 + $0x2c] sm:$0xff]
    %v90 = vld [vmem:[#allocation2 + $0x34] sm:$0xf]
    %v91 = vld [vmem:[#allocation5] sm:$0xff]
    %v92 = vld [vmem:[#allocation5 + $0x8] sm:$0xff]
    %v93 = vld [vmem:[#allocation5 + $0x10] sm:$0xff]
    %v94 = vld [vmem:[#allocation5 + $0x18] sm:$0xff]
    %v95 = vld [vmem:[#allocation5 + $0x20] sm:$0xff]
    %v96 = vld [vmem:[#allocation5 + $0x28] sm:$0xff]
    %v97 = vld [vmem:[#allocation5 + $0x30] sm:$0xff]
    %v98 = vld [vmem:[#allocation5 + $0x38] sm:$0xff]
    %v99 = vld [vmem:[#allocation5 + $0x40] sm:$0xff]
    %v100 = vld [vmem:[#allocation5 + $0x48] sm:$0xff]
    %v101 = vld [vmem:[#allocation5 + $0x50] sm:$0xff]
    %v102 = vld [vmem:[#allocation5 + $0x58] sm:$0xff]
    %v103 = vld [vmem:[#allocation5 + $0x60] sm:$0xff]
    %v104 = vld [vmem:[#allocation5 + $0x68] sm:$0xff]
    %v105 = vld [vmem:[#allocation5 + $0x70] sm:$0xff]
    %v106 = vld [vmem:[#allocation5 + $0x78] sm:$0xff]
    %v107 = vld [vmem:[#allocation5 + $0x80] sm:$0xff]
    %v108 = vld [vmem:[#allocation5 + $0x88] sm:$0xff]
    %v109 = vld [vmem:[#allocation5 + $0x90] sm:$0xff]
    %v110 = vld [vmem:[#allocation5 + $0x98] sm:$0xff]
    %v111 = vld [vmem:[#allocation5 + $0xa0] sm:$0xff]
    %v112 = vld [vmem:[#allocation5 + $0xa8] sm:$0xff]
    %v113 = vld [vmem:[#allocation5 + $0xb0] sm:$0xff]
    %v114 = vld [vmem:[#allocation5 + $0xb8] sm:$0xff]
    %v115 = vld [vmem:[#allocation5 + $0xc0] sm:$0xff]
    %v116 = vld [vmem:[#allocation5 + $0xc8] sm:$0xff]
    %v117 = vld [vmem:[#allocation5 + $0xd0] sm:$0xff]
    %v118 = vld [vmem:[#allocation5 + $0xd8] sm:$0xff]
    %v119 = vld [vmem:[#allocation5 + $0xe0] sm:$0xff]
    %v120 = vld [vmem:[#allocation5 + $0xe8] sm:$0xff]
    %v121 = vld [vmem:[#allocation5 + $0xf0] sm:$0xff]
    %v122 = vld [vmem:[#allocation5 + $0xf8] sm:$0xff]
    %v123 = vld [vmem:[#allocation5 + $0x100] sm:$0xff]
    %v124 = vld [vmem:[#allocation5 + $0x108] sm:$0xff]
    %v125 = vld [vmem:[#allocation5 + $0x110] sm:$0xff]
    %v126 = vld [vmem:[#allocation5 + $0x118] sm:$0xff]
    %v127 = vld [vmem:[#allocation5 + $0x120] sm:$0xff]
    %v128 = vld [vmem:[#allocation5 + $0x128] sm:$0xff]
    %v129 = vld [vmem:[#allocation5 + $0x130] sm:$0xff]
    %v130 = vld [vmem:[#allocation5 + $0x138] sm:$0xff]
    %v131 = vld [vmem:[#allocation5 + $0x140] sm:$0xff]
    %v132 = vld [vmem:[#allocation5 + $0x148] sm:$0xff]
    %v133 = vld [vmem:[#allocation5 + $0x150] sm:$0xff]
    %v134 = vld [vmem:[#allocation5 + $0x158] sm:$0xff]
    %v135 = vld [vmem:[#allocation5 + $0x160] sm:$0xff]
    %v136 = vld [vmem:[#allocation5 + $0x168] sm:$0xff]
    %v137 = vld [vmem:[#allocation5 + $0x170] sm:$0xff]
    %v138 = vld [vmem:[#allocation5 + $0x178] sm:$0xff]
    %v139 = vld [vmem:[#allocation5 + $0x180] sm:$0xff]
    %v140 = vld [vmem:[#allocation5 + $0x188] sm:$0xff]
    %v141 = vld [vmem:[#allocation5 + $0x190] sm:$0xff]
    %v142 = vld [vmem:[#allocation5 + $0x198] sm:$0xff]
    %v143 = vld [vmem:[#allocation5 + $0x1a0] sm:$0xff]
    %v144 = vld [vmem:[#allocation5 + $0x1a8] sm:$0xff]
    %v145 = vld [vmem:[#allocation5 + $0x1b0] sm:$0xff]
    %v146 = vld [vmem:[#allocation5 + $0x1b8] sm:$0xff]
    %v147 = vld [vmem:[#allocation5 + $0x1c0] sm:$0xff]
    %v148 = vld [vmem:[#allocation5 + $0x1c8] sm:$0xff]
    %v149 = vld [vmem:[#allocation5 + $0x1d0] sm:$0xff]
    %v150 = vld [vmem:[#allocation5 + $0x1d8] sm:$0xff]
    %v151 = vld [vmem:[#allocation5 + $0x1e0] sm:$0xff]
    %v152 = vld [vmem:[#allocation5 + $0x1e8] sm:$0xff]
    %v153 = vld [vmem:[#allocation5 + $0x1f0] sm:$0xff]
    %v154 = vld [vmem:[#allocation5 + $0x1f8] sm:$0xff]
    %v155 = vld [vmem:[#allocation5 + $0x200] sm:$0xff]
    %v156 = vld [vmem:[#allocation5 + $0x208] sm:$0xff]
    %v157 = vld [vmem:[#allocation5 + $0x210] sm:$0xff]
    %v158 = vld [vmem:[#allocation5 + $0x218] sm:$0xff]
    %v159 = vld [vmem:[#allocation5 + $0x220] sm:$0xff]
    %v160 = vld [vmem:[#allocation5 + $0x228] sm:$0xff]
    %v161 = vld [vmem:[#allocation5 + $0x230] sm:$0xff]
    %v162 = vld [vmem:[#allocation5 + $0x238] sm:$0xff]
    %v163 = vld [vmem:[#allocation5 + $0x240] sm:$0xff]
    %v164 = vld [vmem:[#allocation5 + $0x248] sm:$0xff]
    %v165 = vld [vmem:[#allocation5 + $0x250] sm:$0xff]
    %v166 = vld [vmem:[#allocation5 + $0x258] sm:$0xff]
    %v167 = vld [vmem:[#allocation5 + $0x260] sm:$0xff]
    %v168 = vld [vmem:[#allocation5 + $0x268] sm:$0xff]
    %v169 = vld [vmem:[#allocation5 + $0x270] sm:$0xff]
    %v170 = vld [vmem:[#allocation5 + $0x278] sm:$0xff]
    %v171 = vld [vmem:[#allocation5 + $0x280] sm:$0xff]
    %v172 = vld [vmem:[#allocation5 + $0x288] sm:$0xff]
    %v173 = vld [vmem:[#allocation5 + $0x290] sm:$0xff]
    %v174 = vld [vmem:[#allocation5 + $0x298] sm:$0xff]
    %v175 = vld [vmem:[#allocation5 + $0x2a0] sm:$0xff]
    %v176 = vld [vmem:[#allocation5 + $0x2a8] sm:$0xff]
    %v177 = vld [vmem:[#allocation5 + $0x2b0] sm:$0xff]
    %v178 = vld [vmem:[#allocation5 + $0x2b8] sm:$0xff]
    %v179 = vld [vmem:[#allocation5 + $0x2c0] sm:$0xff]
    %v180 = vld [vmem:[#allocation5 + $0x2c8] sm:$0xff]
    %v181 = vld [vmem:[#allocation5 + $0x2d0] sm:$0xff]
    %v182 = vld [vmem:[#allocation5 + $0x2d8] sm:$0xff]
    %v183 = vld [vmem:[#allocation5 + $0x2e0] sm:$0xff]
    %v184 = vld [vmem:[#allocation5 + $0x2e8] sm:$0xff]
    %v185 = vld [vmem:[#allocation5 + $0x2f0] sm:$0xff]
    %v186 = vld [vmem:[#allocation5 + $0x2f8] sm:$0xff]
    %v187 = vld [vmem:[#allocation5 + $0x300] sm:$0xff]
    %v188 = vld [vmem:[#allocation5 + $0x308] sm:$0xff]
    %v189 = vld [vmem:[%s2] sm:$0x3]
    %v191 = vlaneseq
    %v192 = vshrl.u32 %v191, 7
    %v193 = vsub.s32 0, %v192
    %v194 = vrot.slane %v189, %v193
    %v195 = vlaneseq
    %v196 = vshrl.u32 %v195, 7
    %v197 = vsub.s32 1, %v196
    %v198 = vrot.slane %v189, %v197
    %v209 = vunpack.c.l.b16 %v83
    %v210 = vunpack.c.h.b16 %v83
    %v211 = vunpack.c.l.b16 %v84
    %v212 = vunpack.c.h.b16 %v84
    %v213 = vunpack.c.l.b16 %v85
    %v214 = vunpack.c.h.b16 %v85
    %v215 = vunpack.c.l.b16 %v86
    %v216 = vunpack.c.l.b16 %v87
    %v217 = vunpack.c.h.b16 %v87
    %v218 = vunpack.c.l.b16 %v88
    %v219 = vunpack.c.h.b16 %v88
    %v220 = vunpack.c.l.b16 %v89
    %v221 = vunpack.c.h.b16 %v89
    %v222 = vunpack.c.l.b16 %v90
    %v223 = vpack.c.b16 %v216, %v209
    %v224 = vpack.c.b16 %v217, %v210
    %v225 = vpack.c.b16 %v218, %v211
    %v226 = vpack.c.b16 %v219, %v212
    %v227 = vpack.c.b16 %v220, %v213
    %v228 = vpack.c.b16 %v221, %v214
    %v229 = vpack.c.b16 %v222, %v215
    %v334 = vunpack.c.l.b16 %v91
    %v335 = vunpack.c.h.b16 %v91
    %v336 = vunpack.c.l.b16 %v92
    %v337 = vunpack.c.h.b16 %v92
    %v338 = vunpack.c.l.b16 %v93
    %v339 = vunpack.c.h.b16 %v93
    %v340 = vunpack.c.l.b16 %v94
    %v341 = vunpack.c.h.b16 %v94
    %v342 = vunpack.c.l.b16 %v95
    %v343 = vunpack.c.h.b16 %v95
    %v344 = vunpack.c.l.b16 %v96
    %v345 = vunpack.c.h.b16 %v96
    %v346 = vunpack.c.l.b16 %v97
    %v347 = vunpack.c.h.b16 %v97
    %v348 = vunpack.c.l.b16 %v98
    %v349 = vunpack.c.h.b16 %v98
    %v350 = vunpack.c.l.b16 %v99
    %v351 = vunpack.c.h.b16 %v99
    %v352 = vunpack.c.l.b16 %v100
    %v353 = vunpack.c.h.b16 %v100
    %v354 = vunpack.c.l.b16 %v101
    %v355 = vunpack.c.h.b16 %v101
    %v356 = vunpack.c.l.b16 %v102
    %v357 = vunpack.c.h.b16 %v102
    %v358 = vunpack.c.l.b16 %v103
    %v359 = vunpack.c.h.b16 %v103
    %v360 = vunpack.c.l.b16 %v104
    %v361 = vunpack.c.h.b16 %v104
    %v362 = vunpack.c.l.b16 %v105
    %v363 = vunpack.c.h.b16 %v105
    %v364 = vunpack.c.l.b16 %v106
    %v365 = vunpack.c.h.b16 %v106
    %v366 = vunpack.c.l.b16 %v107
    %v367 = vunpack.c.h.b16 %v107
    %v368 = vunpack.c.l.b16 %v108
    %v369 = vunpack.c.h.b16 %v108
    %v370 = vunpack.c.l.b16 %v109
    %v371 = vunpack.c.h.b16 %v109
    %v372 = vunpack.c.l.b16 %v110
    %v373 = vunpack.c.h.b16 %v110
    %v374 = vunpack.c.l.b16 %v111
    %v375 = vunpack.c.h.b16 %v111
    %v376 = vunpack.c.l.b16 %v112
    %v377 = vunpack.c.h.b16 %v112
    %v378 = vunpack.c.l.b16 %v113
    %v379 = vunpack.c.h.b16 %v113
    %v380 = vunpack.c.l.b16 %v114
    %v381 = vunpack.c.h.b16 %v114
    %v382 = vunpack.c.l.b16 %v115
    %v383 = vunpack.c.h.b16 %v115
    %v384 = vunpack.c.l.b16 %v116
    %v385 = vunpack.c.h.b16 %v116
    %v386 = vunpack.c.l.b16 %v117
    %v387 = vunpack.c.h.b16 %v117
    %v388 = vunpack.c.l.b16 %v118
    %v389 = vunpack.c.h.b16 %v118
    %v390 = vunpack.c.l.b16 %v119
    %v391 = vunpack.c.h.b16 %v119
    %v392 = vunpack.c.l.b16 %v120
    %v393 = vunpack.c.h.b16 %v120
    %v394 = vunpack.c.l.b16 %v121
    %v395 = vunpack.c.h.b16 %v121
    %v396 = vunpack.c.l.b16 %v122
    %v397 = vunpack.c.h.b16 %v122
    %v398 = vunpack.c.l.b16 %v123
    %v399 = vunpack.c.h.b16 %v123
    %v400 = vunpack.c.l.b16 %v124
    %v401 = vunpack.c.h.b16 %v124
    %v402 = vunpack.c.l.b16 %v125
    %v403 = vunpack.c.h.b16 %v125
    %v404 = vunpack.c.l.b16 %v126
    %v405 = vunpack.c.h.b16 %v126
    %v406 = vunpack.c.l.b16 %v127
    %v407 = vunpack.c.h.b16 %v127
    %v408 = vunpack.c.l.b16 %v128
    %v409 = vunpack.c.h.b16 %v128
    %v410 = vunpack.c.l.b16 %v129
    %v411 = vunpack.c.h.b16 %v129
    %v412 = vunpack.c.l.b16 %v130
    %v413 = vunpack.c.h.b16 %v130
    %v414 = vunpack.c.l.b16 %v131
    %v415 = vunpack.c.h.b16 %v131
    %v416 = vunpack.c.l.b16 %v132
    %v417 = vunpack.c.h.b16 %v132
    %v418 = vunpack.c.l.b16 %v133
    %v419 = vunpack.c.h.b16 %v133
    %v420 = vunpack.c.l.b16 %v134
    %v421 = vunpack.c.h.b16 %v134
    %v422 = vunpack.c.l.b16 %v135
    %v423 = vunpack.c.h.b16 %v135
    %v424 = vunpack.c.l.b16 %v136
    %v425 = vunpack.c.h.b16 %v136
    %v426 = vunpack.c.l.b16 %v137
    %v427 = vunpack.c.h.b16 %v137
    %v428 = vunpack.c.l.b16 %v138
    %v429 = vunpack.c.h.b16 %v138
    %v430 = vunpack.c.l.b16 %v139
    %v431 = vunpack.c.h.b16 %v139
    %v432 = vunpack.c.l.b16 %v140
    %v433 = vunpack.c.h.b16 %v140
    %v434 = vunpack.c.l.b16 %v141
    %v435 = vunpack.c.h.b16 %v141
    %v436 = vunpack.c.l.b16 %v142
    %v437 = vunpack.c.h.b16 %v142
    %v438 = vunpack.c.l.b16 %v143
    %v439 = vunpack.c.h.b16 %v143
    %v440 = vunpack.c.l.b16 %v144
    %v441 = vunpack.c.h.b16 %v144
    %v442 = vunpack.c.l.b16 %v145
    %v443 = vunpack.c.h.b16 %v145
    %v444 = vunpack.c.l.b16 %v146
    %v445 = vunpack.c.h.b16 %v146
    %v446 = vunpack.c.l.b16 %v147
    %v447 = vunpack.c.h.b16 %v147
    %v448 = vunpack.c.l.b16 %v148
    %v449 = vunpack.c.h.b16 %v148
    %v450 = vunpack.c.l.b16 %v149
    %v451 = vunpack.c.h.b16 %v149
    %v452 = vunpack.c.l.b16 %v150
    %v453 = vunpack.c.h.b16 %v150
    %v454 = vunpack.c.l.b16 %v151
    %v455 = vunpack.c.h.b16 %v151
    %v456 = vunpack.c.l.b16 %v152
    %v457 = vunpack.c.h.b16 %v152
    %v458 = vunpack.c.l.b16 %v153
    %v459 = vunpack.c.h.b16 %v153
    %v460 = vunpack.c.l.b16 %v154
    %v461 = vunpack.c.h.b16 %v154
    %v462 = vunpack.c.l.b16 %v155
    %v463 = vunpack.c.h.b16 %v155
    %v464 = vunpack.c.l.b16 %v156
    %v465 = vunpack.c.h.b16 %v156
    %v466 = vunpack.c.l.b16 %v157
    %v467 = vunpack.c.h.b16 %v157
    %v468 = vunpack.c.l.b16 %v158
    %v469 = vunpack.c.h.b16 %v158
    %v470 = vunpack.c.l.b16 %v159
    %v471 = vunpack.c.h.b16 %v159
    %v472 = vunpack.c.l.b16 %v160
    %v473 = vunpack.c.h.b16 %v160
    %v474 = vunpack.c.l.b16 %v161
    %v475 = vunpack.c.h.b16 %v161
    %v476 = vunpack.c.l.b16 %v162
    %v477 = vunpack.c.h.b16 %v162
    %v478 = vunpack.c.l.b16 %v163
    %v479 = vunpack.c.h.b16 %v163
    %v480 = vunpack.c.l.b16 %v164
    %v481 = vunpack.c.h.b16 %v164
    %v482 = vunpack.c.l.b16 %v165
    %v483 = vunpack.c.h.b16 %v165
    %v484 = vunpack.c.l.b16 %v166
    %v485 = vunpack.c.h.b16 %v166
    %v486 = vunpack.c.l.b16 %v167
    %v487 = vunpack.c.h.b16 %v167
    %v488 = vunpack.c.l.b16 %v168
    %v489 = vunpack.c.h.b16 %v168
    %v490 = vunpack.c.l.b16 %v169
    %v491 = vunpack.c.h.b16 %v169
    %v492 = vunpack.c.l.b16 %v170
    %v493 = vunpack.c.h.b16 %v170
    %v494 = vunpack.c.l.b16 %v171
    %v495 = vunpack.c.h.b16 %v171
    %v496 = vunpack.c.l.b16 %v172
    %v497 = vunpack.c.h.b16 %v172
    %v498 = vunpack.c.l.b16 %v173
    %v499 = vunpack.c.h.b16 %v173
    %v500 = vunpack.c.l.b16 %v174
    %v501 = vunpack.c.h.b16 %v174
    %v502 = vunpack.c.l.b16 %v175
    %v503 = vunpack.c.h.b16 %v175
    %v504 = vunpack.c.l.b16 %v176
    %v505 = vunpack.c.h.b16 %v176
    %v506 = vunpack.c.l.b16 %v177
    %v507 = vunpack.c.h.b16 %v177
    %v508 = vunpack.c.l.b16 %v178
    %v509 = vunpack.c.h.b16 %v178
    %v510 = vunpack.c.l.b16 %v179
    %v511 = vunpack.c.h.b16 %v179
    %v512 = vunpack.c.l.b16 %v180
    %v513 = vunpack.c.h.b16 %v180
    %v514 = vunpack.c.l.b16 %v181
    %v515 = vunpack.c.h.b16 %v181
    %v516 = vunpack.c.l.b16 %v182
    %v517 = vunpack.c.h.b16 %v182
    %v518 = vunpack.c.l.b16 %v183
    %v519 = vunpack.c.h.b16 %v183
    %v520 = vunpack.c.l.b16 %v184
    %v521 = vunpack.c.h.b16 %v184
    %v522 = vunpack.c.l.b16 %v185
    %v523 = vunpack.c.h.b16 %v185
    %v524 = vunpack.c.l.b16 %v186
    %v525 = vunpack.c.h.b16 %v186
    %v526 = vunpack.c.l.b16 %v187
    %v527 = vunpack.c.h.b16 %v187
    %v528 = vunpack.c.l.b16 %v188
    %v529 = vunpack.c.h.b16 %v188
    %v530 = vpack.c.b16 %v336, %v334
    %v531 = vpack.c.b16 %v337, %v335
    %v532 = vpack.c.b16 %v340, %v338
    %v533 = vpack.c.b16 %v341, %v339
    %v534 = vpack.c.b16 %v344, %v342
    %v535 = vpack.c.b16 %v345, %v343
    %v536 = vpack.c.b16 %v348, %v346
    %v537 = vpack.c.b16 %v349, %v347
    %v538 = vpack.c.b16 %v352, %v350
    %v539 = vpack.c.b16 %v353, %v351
    %v540 = vpack.c.b16 %v356, %v354
    %v541 = vpack.c.b16 %v357, %v355
    %v542 = vpack.c.b16 %v360, %v358
    %v543 = vpack.c.b16 %v361, %v359
    %v544 = vpack.c.b16 %v364, %v362
    %v545 = vpack.c.b16 %v365, %v363
    %v546 = vpack.c.b16 %v368, %v366
    %v547 = vpack.c.b16 %v369, %v367
    %v548 = vpack.c.b16 %v372, %v370
    %v549 = vpack.c.b16 %v373, %v371
    %v550 = vpack.c.b16 %v376, %v374
    %v551 = vpack.c.b16 %v377, %v375
    %v552 = vpack.c.b16 %v380, %v378
    %v553 = vpack.c.b16 %v381, %v379
    %v554 = vpack.c.b16 %v384, %v382
    %v555 = vpack.c.b16 %v385, %v383
    %v556 = vpack.c.b16 %v388, %v386
    %v557 = vpack.c.b16 %v389, %v387
    %v558 = vpack.c.b16 %v392, %v390
    %v559 = vpack.c.b16 %v393, %v391
    %v560 = vpack.c.b16 %v396, %v394
    %v561 = vpack.c.b16 %v397, %v395
    %v562 = vpack.c.b16 %v400, %v398
    %v563 = vpack.c.b16 %v401, %v399
    %v564 = vpack.c.b16 %v404, %v402
    %v565 = vpack.c.b16 %v405, %v403
    %v566 = vpack.c.b16 %v408, %v406
    %v567 = vpack.c.b16 %v409, %v407
    %v568 = vpack.c.b16 %v412, %v410
    %v569 = vpack.c.b16 %v413, %v411
    %v570 = vpack.c.b16 %v416, %v414
    %v571 = vpack.c.b16 %v417, %v415
    %v572 = vpack.c.b16 %v420, %v418
    %v573 = vpack.c.b16 %v421, %v419
    %v574 = vpack.c.b16 %v424, %v422
    %v575 = vpack.c.b16 %v425, %v423
    %v576 = vpack.c.b16 %v428, %v426
    %v577 = vpack.c.b16 %v429, %v427
    %v578 = vpack.c.b16 %v432, %v430
    %v579 = vpack.c.b16 %v433, %v431
    %v580 = vpack.c.b16 %v436, %v434
    %v581 = vpack.c.b16 %v437, %v435
    %v582 = vpack.c.b16 %v440, %v438
    %v583 = vpack.c.b16 %v441, %v439
    %v584 = vpack.c.b16 %v444, %v442
    %v585 = vpack.c.b16 %v445, %v443
    %v586 = vpack.c.b16 %v448, %v446
    %v587 = vpack.c.b16 %v449, %v447
    %v588 = vpack.c.b16 %v452, %v450
    %v589 = vpack.c.b16 %v453, %v451
    %v590 = vpack.c.b16 %v456, %v454
    %v591 = vpack.c.b16 %v457, %v455
    %v592 = vpack.c.b16 %v460, %v458
    %v593 = vpack.c.b16 %v461, %v459
    %v594 = vpack.c.b16 %v464, %v462
    %v595 = vpack.c.b16 %v465, %v463
    %v596 = vpack.c.b16 %v468, %v466
    %v597 = vpack.c.b16 %v469, %v467
    %v598 = vpack.c.b16 %v472, %v470
    %v599 = vpack.c.b16 %v473, %v471
    %v600 = vpack.c.b16 %v476, %v474
    %v601 = vpack.c.b16 %v477, %v475
    %v602 = vpack.c.b16 %v480, %v478
    %v603 = vpack.c.b16 %v481, %v479
    %v604 = vpack.c.b16 %v484, %v482
    %v605 = vpack.c.b16 %v485, %v483
    %v606 = vpack.c.b16 %v488, %v486
    %v607 = vpack.c.b16 %v489, %v487
    %v608 = vpack.c.b16 %v492, %v490
    %v609 = vpack.c.b16 %v493, %v491
    %v610 = vpack.c.b16 %v496, %v494
    %v611 = vpack.c.b16 %v497, %v495
    %v612 = vpack.c.b16 %v500, %v498
    %v613 = vpack.c.b16 %v501, %v499
    %v614 = vpack.c.b16 %v504, %v502
    %v615 = vpack.c.b16 %v505, %v503
    %v616 = vpack.c.b16 %v508, %v506
    %v617 = vpack.c.b16 %v509, %v507
    %v618 = vpack.c.b16 %v512, %v510
    %v619 = vpack.c.b16 %v513, %v511
    %v620 = vpack.c.b16 %v516, %v514
    %v621 = vpack.c.b16 %v517, %v515
    %v622 = vpack.c.b16 %v520, %v518
    %v623 = vpack.c.b16 %v521, %v519
    %v624 = vpack.c.b16 %v524, %v522
    %v625 = vpack.c.b16 %v525, %v523
    %v626 = vpack.c.b16 %v528, %v526
    %v627 = vpack.c.b16 %v529, %v527
    %vm726 = vcmask 130048
    %v728 = vsel %vm726, %v229, 0
    %730 = vmatprep.subr.bf16.mxu0 %v531
    %731 = vmatpush1.bf16.msra.mxu0 %v530
    %732 = vmatprep.subr.bf16.mxu0 %v533
    %733 = vmatpush1.bf16.msra.mxu0 %v532
    %734 = vmatprep.subr.bf16.mxu0 %v535
    %735 = vmatpush1.bf16.msra.mxu0 %v534
    %736 = vmatprep.subr.bf16.mxu0 %v537
    %737 = vmatpush1.bf16.msra.mxu0 %v536
    %738 = vmatprep.subr.bf16.mxu0 %v539
    %739 = vmatpush1.bf16.msra.mxu0 %v538
    %740 = vmatprep.subr.bf16.mxu0 %v541
    %741 = vmatpush1.bf16.msra.mxu0 %v540
    %742 = vmatprep.subr.bf16.mxu0 %v543
    %743 = vmatpush1.bf16.msra.mxu0 %v542
    %744 = vmatprep.subr.bf16.mxu0 %v545
    %745 = vmatpush1.bf16.msra.mxu0 %v544
    %746 = vmatprep.subr.bf16.mxu0 %v547
    %747 = vmatpush1.bf16.msra.mxu0 %v546
    %748 = vmatprep.subr.bf16.mxu0 %v549
    %749 = vmatpush1.bf16.msra.mxu0 %v548
    %750 = vmatprep.subr.bf16.mxu0 %v551
    %751 = vmatpush1.bf16.msra.mxu0 %v550
    %752 = vmatprep.subr.bf16.mxu0 %v553
    %753 = vmatpush1.bf16.msra.mxu0 %v552
    %754 = vmatprep.subr.bf16.mxu0 %v555
    %755 = vmatpush1.bf16.msra.mxu0 %v554
    %756 = vmatprep.subr.bf16.mxu0 %v557
    %757 = vmatpush1.bf16.msra.mxu0 %v556
    %758 = vmatprep.subr.bf16.mxu0 %v559
    %759 = vmatpush1.bf16.msra.mxu0 %v558
    %760 = vmatprep.subr.bf16.mxu0 %v561
    %761 = vmatpush1.bf16.msra.mxu0 %v560
    %762 = vmatprep.mubr.bf16.mxu0 %v224
    %763 = vmatmul.mubr.bf16.gmra.mrb[0].mxu0 %v223
    %v764 = vpop.f32.mrb[0].mxu0
    %v765 = vadd.f32 %v194, %v764
    %v766 = vpop.f32.mrb[0].mxu0
    %v767 = vadd.f32 %v198, %v766
    %v768 = vpop.f32.mrb[0].mxu0
    %v769 = vadd.f32 %v194, %v768
    %v770 = vpop.f32.mrb[0].mxu0
    %v771 = vadd.f32 %v198, %v770
    %772 = vdwg.mxu0
    %773 = vmatprep.subr.bf16.mxu0 %v563
    %774 = vmatpush1.bf16.msra.mxu0 %v562
    %775 = vmatprep.subr.bf16.mxu0 %v565
    %776 = vmatpush1.bf16.msra.mxu0 %v564
    %777 = vmatprep.subr.bf16.mxu0 %v567
    %778 = vmatpush1.bf16.msra.mxu0 %v566
    %779 = vmatprep.subr.bf16.mxu0 %v569
    %780 = vmatpush1.bf16.msra.mxu0 %v568
    %781 = vmatprep.subr.bf16.mxu0 %v571
    %782 = vmatpush1.bf16.msra.mxu0 %v570
    %783 = vmatprep.subr.bf16.mxu0 %v573
    %784 = vmatpush1.bf16.msra.mxu0 %v572
    %785 = vmatprep.subr.bf16.mxu0 %v575
    %786 = vmatpush1.bf16.msra.mxu0 %v574
    %787 = vmatprep.subr.bf16.mxu0 %v577
    %788 = vmatpush1.bf16.msra.mxu0 %v576
    %789 = vmatprep.subr.bf16.mxu0 %v579
    %790 = vmatpush1.bf16.msra.mxu0 %v578
    %791 = vmatprep.subr.bf16.mxu0 %v581
    %792 = vmatpush1.bf16.msra.mxu0 %v580
    %793 = vmatprep.subr.bf16.mxu0 %v583
    %794 = vmatpush1.bf16.msra.mxu0 %v582
    %795 = vmatprep.subr.bf16.mxu0 %v585
    %796 = vmatpush1.bf16.msra.mxu0 %v584
    %797 = vmatprep.subr.bf16.mxu0 %v587
    %798 = vmatpush1.bf16.msra.mxu0 %v586
    %799 = vmatprep.subr.bf16.mxu0 %v589
    %800 = vmatpush1.bf16.msra.mxu0 %v588
    %801 = vmatprep.subr.bf16.mxu0 %v591
    %802 = vmatpush1.bf16.msra.mxu0 %v590
    %803 = vmatprep.subr.bf16.mxu0 %v593
    %804 = vmatpush1.bf16.msra.mxu0 %v592
    %805 = vmatprep.mubr.bf16.mxu0 %v226
    %806 = vmatmul.mubr.bf16.gmra.mrb[0].mxu0 %v225
    %v807 = vpop.f32.mrb[0].mxu0
    %v808 = vadd.f32 %v765, %v807
    %v809 = vpop.f32.mrb[0].mxu0
    %v810 = vadd.f32 %v767, %v809
    %v811 = vpop.f32.mrb[0].mxu0
    %v812 = vadd.f32 %v769, %v811
    %v813 = vpop.f32.mrb[0].mxu0
    %v814 = vadd.f32 %v771, %v813
    %815 = vdwg.mxu0
    %816 = vmatprep.subr.bf16.mxu0 %v595
    %817 = vmatpush1.bf16.msra.mxu0 %v594
    %818 = vmatprep.subr.bf16.mxu0 %v597
    %819 = vmatpush1.bf16.msra.mxu0 %v596
    %820 = vmatprep.subr.bf16.mxu0 %v599
    %821 = vmatpush1.bf16.msra.mxu0 %v598
    %822 = vmatprep.subr.bf16.mxu0 %v601
    %823 = vmatpush1.bf16.msra.mxu0 %v600
    %824 = vmatprep.subr.bf16.mxu0 %v603
    %825 = vmatpush1.bf16.msra.mxu0 %v602
    %826 = vmatprep.subr.bf16.mxu0 %v605
    %827 = vmatpush1.bf16.msra.mxu0 %v604
    %828 = vmatprep.subr.bf16.mxu0 %v607
    %829 = vmatpush1.bf16.msra.mxu0 %v606
    %830 = vmatprep.subr.bf16.mxu0 %v609
    %831 = vmatpush1.bf16.msra.mxu0 %v608
    %832 = vmatprep.subr.bf16.mxu0 %v611
    %833 = vmatpush1.bf16.msra.mxu0 %v610
    %834 = vmatprep.subr.bf16.mxu0 %v613
    %835 = vmatpush1.bf16.msra.mxu0 %v612
    %836 = vmatprep.subr.bf16.mxu0 %v615
    %837 = vmatpush1.bf16.msra.mxu0 %v614
    %838 = vmatprep.subr.bf16.mxu0 %v617
    %839 = vmatpush1.bf16.msra.mxu0 %v616
    %840 = vmatprep.subr.bf16.mxu0 %v619
    %841 = vmatpush1.bf16.msra.mxu0 %v618
    %842 = vmatprep.subr.bf16.mxu0 %v621
    %843 = vmatpush1.bf16.msra.mxu0 %v620
    %844 = vmatprep.subr.bf16.mxu0 %v623
    %845 = vmatpush1.bf16.msra.mxu0 %v622
    %846 = vmatprep.subr.bf16.mxu0 %v625
    %847 = vmatpush1.bf16.msra.mxu0 %v624
    %848 = vmatprep.mubr.bf16.mxu0 %v228
    %849 = vmatmul.mubr.bf16.gmra.mrb[0].mxu0 %v227
    %v850 = vpop.f32.mrb[0].mxu0
    %v851 = vadd.f32 %v808, %v850
    %v852 = vpop.f32.mrb[0].mxu0
    %v853 = vadd.f32 %v810, %v852
    %v854 = vpop.f32.mrb[0].mxu0
    %v855 = vadd.f32 %v812, %v854
    %v856 = vpop.f32.mrb[0].mxu0
    %v857 = vadd.f32 %v814, %v856
    %858 = vdwg.mxu0
    %859 = vmatprep.subr.bf16.mxu0 %v627
    %860 = vmatpush1.bf16.msra.mxu0 %v626
    %861 = vmatprep.subr.bf16.mxu0 0
    %862 = vmatpush1.bf16.msra.mxu0 0
    %863 = vmatprep.subr.bf16.mxu0 0
    %864 = vmatpush1.bf16.msra.mxu0 0
    %865 = vmatprep.subr.bf16.mxu0 0
    %866 = vmatpush1.bf16.msra.mxu0 0
    %867 = vmatprep.subr.bf16.mxu0 0
    %868 = vmatpush1.bf16.msra.mxu0 0
    %869 = vmatprep.subr.bf16.mxu0 0
    %870 = vmatpush1.bf16.msra.mxu0 0
    %871 = vmatprep.subr.bf16.mxu0 0
    %872 = vmatpush1.bf16.msra.mxu0 0
    %873 = vmatprep.subr.bf16.mxu0 0
    %874 = vmatpush1.bf16.msra.mxu0 0
    %875 = vmatprep.subr.bf16.mxu0 0
    %876 = vmatpush1.bf16.msra.mxu0 0
    %877 = vmatprep.subr.bf16.mxu0 0
    %878 = vmatpush1.bf16.msra.mxu0 0
    %879 = vmatprep.subr.bf16.mxu0 0
    %880 = vmatpush1.bf16.msra.mxu0 0
    %881 = vmatprep.subr.bf16.mxu0 0
    %882 = vmatpush1.bf16.msra.mxu0 0
    %883 = vmatprep.subr.bf16.mxu0 0
    %884 = vmatpush1.bf16.msra.mxu0 0
    %885 = vmatprep.subr.bf16.mxu0 0
    %886 = vmatpush1.bf16.msra.mxu0 0
    %887 = vmatprep.subr.bf16.mxu0 0
    %888 = vmatpush1.bf16.msra.mxu0 0
    %889 = vmatprep.subr.bf16.mxu0 0
    %890 = vmatpush1.bf16.msra.mxu0 0
    %891 = vmatprep.mubr.bf16.mxu0 0
    %892 = vmatmul.mubr.bf16.gmra.mrb[0].mxu0 %v728
    %v893 = vpop.f32.mrb[0].mxu0
    %v894 = vadd.f32 %v851, %v893
    %v895 = vpop.f32.mrb[0].mxu0
    %v896 = vadd.f32 %v853, %v895
    %v897 = vpop.f32.mrb[0].mxu0
    %v898 = vadd.f32 %v855, %v897
    %v899 = vpop.f32.mrb[0].mxu0
    %v900 = vadd.f32 %v857, %v899
    %901 = vdwg.mxu0
    %v902 = vmul.f32 %v894, 0.1
    %v903 = vmul.f32 %v896, 0.1
    %v904 = vmul.f32 %v898, 0.1
    %v905 = vmul.f32 %v900, 0.1
    %v906 = vmax.f32 %v894, %v902
    %v907 = vmax.f32 %v896, %v903
    %v908 = vmax.f32 %v898, %v904
    %v909 = vmax.f32 %v900, %v905
    %v910 = vpack.c.bf16 %v908, %v906
    %v911 = vpack.c.bf16 %v909, %v907
    %v912 = vld [vmem:[#allocation7] sm:$0xff]
    %v913 = vld [vmem:[#allocation7 + $0x8] sm:$0xff]
    %v914 = vld [vmem:[#allocation7 + $0x10] sm:$0xff]
    %v915 = vld [vmem:[#allocation7 + $0x18] sm:$0xff]
    %v916 = vld [vmem:[#allocation7 + $0x20] sm:$0xff]
    %v917 = vld [vmem:[#allocation7 + $0x28] sm:$0xff]
    %v918 = vld [vmem:[#allocation7 + $0x30] sm:$0xff]
    %v919 = vld [vmem:[#allocation7 + $0x38] sm:$0xff]
    %v920 = vld [vmem:[#allocation7 + $0x40] sm:$0xff]
    %v921 = vld [vmem:[#allocation7 + $0x48] sm:$0xff]
    %v922 = vld [vmem:[#allocation7 + $0x50] sm:$0xff]
    %v923 = vld [vmem:[#allocation7 + $0x58] sm:$0xff]
    %v924 = vld [vmem:[#allocation7 + $0x60] sm:$0xff]
    %v925 = vld [vmem:[#allocation7 + $0x68] sm:$0xff]
    %v926 = vld [vmem:[#allocation7 + $0x70] sm:$0xff]
    %v927 = vld [vmem:[#allocation7 + $0x78] sm:$0xff]
    %v928 = vld [vmem:[#allocation7 + $0x80] sm:$0xff]
    %v929 = vld [vmem:[#allocation7 + $0x88] sm:$0xff]
    %v930 = vld [vmem:[#allocation7 + $0x90] sm:$0xff]
    %v931 = vld [vmem:[#allocation7 + $0x98] sm:$0xff]
    %v932 = vld [vmem:[#allocation7 + $0xa0] sm:$0xff]
    %v933 = vld [vmem:[#allocation7 + $0xa8] sm:$0xff]
    %v934 = vld [vmem:[#allocation7 + $0xb0] sm:$0xff]
    %v935 = vld [vmem:[#allocation7 + $0xb8] sm:$0xff]
    %v936 = vld [vmem:[#allocation7 + $0xc0] sm:$0xff]
    %v937 = vld [vmem:[#allocation7 + $0xc8] sm:$0xff]
    %v938 = vld [vmem:[#allocation7 + $0xd0] sm:$0xff]
    %v939 = vld [vmem:[#allocation7 + $0xd8] sm:$0xff]
    %v940 = vld [vmem:[#allocation7 + $0xe0] sm:$0xff]
    %v941 = vld [vmem:[#allocation7 + $0xe8] sm:$0xff]
    %v942 = vld [vmem:[#allocation7 + $0xf0] sm:$0xff]
    %v943 = vld [vmem:[#allocation7 + $0xf8] sm:$0xff]
    %v944 = vld [vmem:[%s4] sm:$0x3]
    %v946 = vlaneseq
    %v947 = vshrl.u32 %v946, 7
    %v948 = vsub.s32 0, %v947
    %v949 = vrot.slane %v944, %v948
    %v950 = vlaneseq
    %v951 = vshrl.u32 %v950, 7
    %v952 = vsub.s32 1, %v951
    %v953 = vrot.slane %v944, %v952
    %v988 = vunpack.c.l.b16 %v912
    %v989 = vunpack.c.h.b16 %v912
    %v990 = vunpack.c.l.b16 %v913
    %v991 = vunpack.c.h.b16 %v913
    %v992 = vunpack.c.l.b16 %v914
    %v993 = vunpack.c.h.b16 %v914
    %v994 = vunpack.c.l.b16 %v915
    %v995 = vunpack.c.h.b16 %v915
    %v996 = vunpack.c.l.b16 %v916
    %v997 = vunpack.c.h.b16 %v916
    %v998 = vunpack.c.l.b16 %v917
    %v999 = vunpack.c.h.b16 %v917
    %v1000 = vunpack.c.l.b16 %v918
    %v1001 = vunpack.c.h.b16 %v918
    %v1002 = vunpack.c.l.b16 %v919
    %v1003 = vunpack.c.h.b16 %v919
    %v1004 = vunpack.c.l.b16 %v920
    %v1005 = vunpack.c.h.b16 %v920
    %v1006 = vunpack.c.l.b16 %v921
    %v1007 = vunpack.c.h.b16 %v921
    %v1008 = vunpack.c.l.b16 %v922
    %v1009 = vunpack.c.h.b16 %v922
    %v1010 = vunpack.c.l.b16 %v923
    %v1011 = vunpack.c.h.b16 %v923
    %v1012 = vunpack.c.l.b16 %v924
    %v1013 = vunpack.c.h.b16 %v924
    %v1014 = vunpack.c.l.b16 %v925
    %v1015 = vunpack.c.h.b16 %v925
    %v1016 = vunpack.c.l.b16 %v926
    %v1017 = vunpack.c.h.b16 %v926
    %v1018 = vunpack.c.l.b16 %v927
    %v1019 = vunpack.c.h.b16 %v927
    %v1020 = vunpack.c.l.b16 %v928
    %v1021 = vunpack.c.h.b16 %v928
    %v1022 = vunpack.c.l.b16 %v929
    %v1023 = vunpack.c.h.b16 %v929
    %v1024 = vunpack.c.l.b16 %v930
    %v1025 = vunpack.c.h.b16 %v930
    %v1026 = vunpack.c.l.b16 %v931
    %v1027 = vunpack.c.h.b16 %v931
    %v1028 = vunpack.c.l.b16 %v932
    %v1029 = vunpack.c.h.b16 %v932
    %v1030 = vunpack.c.l.b16 %v933
    %v1031 = vunpack.c.h.b16 %v933
    %v1032 = vunpack.c.l.b16 %v934
    %v1033 = vunpack.c.h.b16 %v934
    %v1034 = vunpack.c.l.b16 %v935
    %v1035 = vunpack.c.h.b16 %v935
    %v1036 = vunpack.c.l.b16 %v936
    %v1037 = vunpack.c.h.b16 %v936
    %v1038 = vunpack.c.l.b16 %v937
    %v1039 = vunpack.c.h.b16 %v937
    %v1040 = vunpack.c.l.b16 %v938
    %v1041 = vunpack.c.h.b16 %v938
    %v1042 = vunpack.c.l.b16 %v939
    %v1043 = vunpack.c.h.b16 %v939
    %v1044 = vunpack.c.l.b16 %v940
    %v1045 = vunpack.c.h.b16 %v940
    %v1046 = vunpack.c.l.b16 %v941
    %v1047 = vunpack.c.h.b16 %v941
    %v1048 = vunpack.c.l.b16 %v942
    %v1049 = vunpack.c.h.b16 %v942
    %v1050 = vunpack.c.l.b16 %v943
    %v1051 = vunpack.c.h.b16 %v943
    %v1052 = vpack.c.b16 %v990, %v988
    %v1053 = vpack.c.b16 %v991, %v989
    %v1054 = vpack.c.b16 %v994, %v992
    %v1055 = vpack.c.b16 %v995, %v993
    %v1056 = vpack.c.b16 %v998, %v996
    %v1057 = vpack.c.b16 %v999, %v997
    %v1058 = vpack.c.b16 %v1002, %v1000
    %v1059 = vpack.c.b16 %v1003, %v1001
    %v1060 = vpack.c.b16 %v1006, %v1004
    %v1061 = vpack.c.b16 %v1007, %v1005
    %v1062 = vpack.c.b16 %v1010, %v1008
    %v1063 = vpack.c.b16 %v1011, %v1009
    %v1064 = vpack.c.b16 %v1014, %v1012
    %v1065 = vpack.c.b16 %v1015, %v1013
    %v1066 = vpack.c.b16 %v1018, %v1016
    %v1067 = vpack.c.b16 %v1019, %v1017
    %v1068 = vpack.c.b16 %v1022, %v1020
    %v1069 = vpack.c.b16 %v1023, %v1021
    %v1070 = vpack.c.b16 %v1026, %v1024
    %v1071 = vpack.c.b16 %v1027, %v1025
    %v1072 = vpack.c.b16 %v1030, %v1028
    %v1073 = vpack.c.b16 %v1031, %v1029
    %v1074 = vpack.c.b16 %v1034, %v1032
    %v1075 = vpack.c.b16 %v1035, %v1033
    %v1076 = vpack.c.b16 %v1038, %v1036
    %v1077 = vpack.c.b16 %v1039, %v1037
    %v1078 = vpack.c.b16 %v1042, %v1040
    %v1079 = vpack.c.b16 %v1043, %v1041
    %v1080 = vpack.c.b16 %v1046, %v1044
    %v1081 = vpack.c.b16 %v1047, %v1045
    %v1082 = vpack.c.b16 %v1050, %v1048
    %v1083 = vpack.c.b16 %v1051, %v1049
    %1116 = vmatprep.subr.bf16.mxu0 %v1053
    %1117 = vmatpush1.bf16.msra.mxu0 %v1052
    %1118 = vmatprep.subr.bf16.mxu0 %v1055
    %1119 = vmatpush1.bf16.msra.mxu0 %v1054
    %1120 = vmatprep.subr.bf16.mxu0 %v1057
    %1121 = vmatpush1.bf16.msra.mxu0 %v1056
    %1122 = vmatprep.subr.bf16.mxu0 %v1059
    %1123 = vmatpush1.bf16.msra.mxu0 %v1058
    %1124 = vmatprep.subr.bf16.mxu0 %v1061
    %1125 = vmatpush1.bf16.msra.mxu0 %v1060
    %1126 = vmatprep.subr.bf16.mxu0 %v1063
    %1127 = vmatpush1.bf16.msra.mxu0 %v1062
    %1128 = vmatprep.subr.bf16.mxu0 %v1065
    %1129 = vmatpush1.bf16.msra.mxu0 %v1064
    %1130 = vmatprep.subr.bf16.mxu0 %v1067
    %1131 = vmatpush1.bf16.msra.mxu0 %v1066
    %1132 = vmatprep.subr.bf16.mxu0 %v1069
    %1133 = vmatpush1.bf16.msra.mxu0 %v1068
    %1134 = vmatprep.subr.bf16.mxu0 %v1071
    %1135 = vmatpush1.bf16.msra.mxu0 %v1070
    %1136 = vmatprep.subr.bf16.mxu0 %v1073
    %1137 = vmatpush1.bf16.msra.mxu0 %v1072
    %1138 = vmatprep.subr.bf16.mxu0 %v1075
    %1139 = vmatpush1.bf16.msra.mxu0 %v1074
    %1140 = vmatprep.subr.bf16.mxu0 %v1077
    %1141 = vmatpush1.bf16.msra.mxu0 %v1076
    %1142 = vmatprep.subr.bf16.mxu0 %v1079
    %1143 = vmatpush1.bf16.msra.mxu0 %v1078
    %1144 = vmatprep.subr.bf16.mxu0 %v1081
    %1145 = vmatpush1.bf16.msra.mxu0 %v1080
    %1146 = vmatprep.subr.bf16.mxu0 %v1083
    %1147 = vmatpush1.bf16.msra.mxu0 %v1082
    %1148 = vmatprep.mubr.bf16.mxu0 %v911
    %1149 = vmatmul.mubr.bf16.gmra.mrb[0].mxu0 %v910
    %v1150 = vpop.f32.mrb[0].mxu0
    %v1151 = vadd.f32 %v949, %v1150
    %v1152 = vpop.f32.mrb[0].mxu0
    %v1153 = vadd.f32 %v953, %v1152
    %v1154 = vpop.f32.mrb[0].mxu0
    %v1155 = vadd.f32 %v949, %v1154
    %v1156 = vpop.f32.mrb[0].mxu0
    %v1157 = vadd.f32 %v953, %v1156
    %1158 = vdwg.mxu0
    %v1159 = vmul.f32 %v1151, 0.1
    %v1160 = vmul.f32 %v1153, 0.1
    %v1161 = vmul.f32 %v1155, 0.1
    %v1162 = vmul.f32 %v1157, 0.1
    %v1163 = vmax.f32 %v1151, %v1159
    %v1164 = vmax.f32 %v1153, %v1160
    %v1165 = vmax.f32 %v1155, %v1161
    %v1166 = vmax.f32 %v1157, %v1162
    %v1167 = vpack.c.bf16 %v1165, %v1163
    %v1168 = vpack.c.bf16 %v1166, %v1164
    %v1169 = vld [vmem:[#allocation8] sm:$0xf]
    %v1170 = vld [vmem:[#allocation8 + $0x4] sm:$0xf]
    %v1171 = vld [vmem:[#allocation8 + $0x8] sm:$0xf]
    %v1172 = vld [vmem:[#allocation8 + $0xc] sm:$0xf]
    %v1173 = vld [vmem:[#allocation8 + $0x10] sm:$0xf]
    %v1174 = vld [vmem:[#allocation8 + $0x14] sm:$0xf]
    %v1175 = vld [vmem:[#allocation8 + $0x18] sm:$0xf]
    %v1176 = vld [vmem:[#allocation8 + $0x1c] sm:$0xf]
    %v1177 = vld [vmem:[#allocation8 + $0x20] sm:$0xf]
    %v1178 = vld [vmem:[#allocation8 + $0x24] sm:$0xf]
    %v1179 = vld [vmem:[#allocation8 + $0x28] sm:$0xf]
    %v1180 = vld [vmem:[#allocation8 + $0x2c] sm:$0xf]
    %v1181 = vld [vmem:[#allocation8 + $0x30] sm:$0xf]
    %v1182 = vld [vmem:[#allocation8 + $0x34] sm:$0xf]
    %v1183 = vld [vmem:[#allocation8 + $0x38] sm:$0xf]
    %v1184 = vld [vmem:[#allocation8 + $0x3c] sm:$0xf]
    %v1185 = vld [vmem:[#allocation8 + $0x40] sm:$0xf]
    %v1186 = vld [vmem:[#allocation8 + $0x44] sm:$0xf]
    %v1187 = vld [vmem:[#allocation8 + $0x48] sm:$0xf]
    %v1188 = vld [vmem:[#allocation8 + $0x4c] sm:$0xf]
    %v1189 = vld [vmem:[#allocation8 + $0x50] sm:$0xf]
    %v1190 = vld [vmem:[#allocation8 + $0x54] sm:$0xf]
    %v1191 = vld [vmem:[#allocation8 + $0x58] sm:$0xf]
    %v1192 = vld [vmem:[#allocation8 + $0x5c] sm:$0xf]
    %v1193 = vld [vmem:[#allocation8 + $0x60] sm:$0xf]
    %v1194 = vld [vmem:[#allocation8 + $0x64] sm:$0xf]
    %v1195 = vld [vmem:[#allocation8 + $0x68] sm:$0xf]
    %v1196 = vld [vmem:[#allocation8 + $0x6c] sm:$0xf]
    %v1197 = vld [vmem:[#allocation8 + $0x70] sm:$0xf]
    %v1198 = vld [vmem:[#allocation8 + $0x74] sm:$0xf]
    %v1199 = vld [vmem:[#allocation8 + $0x78] sm:$0xf]
    %v1200 = vld [vmem:[#allocation8 + $0x7c] sm:$0xf]
    %v1201 = vld [vmem:[%s6] sm:$0x1]
    %v1203 = vlaneseq
    %v1204 = vshrl.u32 %v1203, 7
    %v1205 = vsub.s32 0, %v1204
    %v1206 = vrot.slane %v1201, %v1205
    %v1240 = vunpack.c.l.b16 %v1169
    %v1241 = vunpack.c.l.b16 %v1170
    %v1242 = vunpack.c.l.b16 %v1171
    %v1243 = vunpack.c.l.b16 %v1172
    %v1244 = vunpack.c.l.b16 %v1173
    %v1245 = vunpack.c.l.b16 %v1174
    %v1246 = vunpack.c.l.b16 %v1175
    %v1247 = vunpack.c.l.b16 %v1176
    %v1248 = vunpack.c.l.b16 %v1177
    %v1249 = vunpack.c.l.b16 %v1178
    %v1250 = vunpack.c.l.b16 %v1179
    %v1251 = vunpack.c.l.b16 %v1180
    %v1252 = vunpack.c.l.b16 %v1181
    %v1253 = vunpack.c.l.b16 %v1182
    %v1254 = vunpack.c.l.b16 %v1183
    %v1255 = vunpack.c.l.b16 %v1184
    %v1256 = vunpack.c.l.b16 %v1185
    %v1257 = vunpack.c.l.b16 %v1186
    %v1258 = vunpack.c.l.b16 %v1187
    %v1259 = vunpack.c.l.b16 %v1188
    %v1260 = vunpack.c.l.b16 %v1189
    %v1261 = vunpack.c.l.b16 %v1190
    %v1262 = vunpack.c.l.b16 %v1191
    %v1263 = vunpack.c.l.b16 %v1192
    %v1264 = vunpack.c.l.b16 %v1193
    %v1265 = vunpack.c.l.b16 %v1194
    %v1266 = vunpack.c.l.b16 %v1195
    %v1267 = vunpack.c.l.b16 %v1196
    %v1268 = vunpack.c.l.b16 %v1197
    %v1269 = vunpack.c.l.b16 %v1198
    %v1270 = vunpack.c.l.b16 %v1199
    %v1271 = vunpack.c.l.b16 %v1200
    %v1272 = vpack.c.b16 %v1241, %v1240
    %v1273 = vpack.c.b16 %v1243, %v1242
    %v1274 = vpack.c.b16 %v1245, %v1244
    %v1275 = vpack.c.b16 %v1247, %v1246
    %v1276 = vpack.c.b16 %v1249, %v1248
    %v1277 = vpack.c.b16 %v1251, %v1250
    %v1278 = vpack.c.b16 %v1253, %v1252
    %v1279 = vpack.c.b16 %v1255, %v1254
    %v1280 = vpack.c.b16 %v1257, %v1256
    %v1281 = vpack.c.b16 %v1259, %v1258
    %v1282 = vpack.c.b16 %v1261, %v1260
    %v1283 = vpack.c.b16 %v1263, %v1262
    %v1284 = vpack.c.b16 %v1265, %v1264
    %v1285 = vpack.c.b16 %v1267, %v1266
    %v1286 = vpack.c.b16 %v1269, %v1268
    %v1287 = vpack.c.b16 %v1271, %v1270
    %1304 = vmatprep.subr.bf16.mxu0 0
    %1305 = vmatpush1.bf16.msra.mxu0 %v1272
    %1306 = vmatprep.subr.bf16.mxu0 0
    %1307 = vmatpush1.bf16.msra.mxu0 %v1273
    %1308 = vmatprep.subr.bf16.mxu0 0
    %1309 = vmatpush1.bf16.msra.mxu0 %v1274
    %1310 = vmatprep.subr.bf16.mxu0 0
    %1311 = vmatpush1.bf16.msra.mxu0 %v1275
    %1312 = vmatprep.subr.bf16.mxu0 0
    %1313 = vmatpush1.bf16.msra.mxu0 %v1276
    %1314 = vmatprep.subr.bf16.mxu0 0
    %1315 = vmatpush1.bf16.msra.mxu0 %v1277
    %1316 = vmatprep.subr.bf16.mxu0 0
    %1317 = vmatpush1.bf16.msra.mxu0 %v1278
    %1318 = vmatprep.subr.bf16.mxu0 0
    %1319 = vmatpush1.bf16.msra.mxu0 %v1279
    %1320 = vmatprep.subr.bf16.mxu0 0
    %1321 = vmatpush1.bf16.msra.mxu0 %v1280
    %1322 = vmatprep.subr.bf16.mxu0 0
    %1323 = vmatpush1.bf16.msra.mxu0 %v1281
    %1324 = vmatprep.subr.bf16.mxu0 0
    %1325 = vmatpush1.bf16.msra.mxu0 %v1282
    %1326 = vmatprep.subr.bf16.mxu0 0
    %1327 = vmatpush1.bf16.msra.mxu0 %v1283
    %1328 = vmatprep.subr.bf16.mxu0 0
    %1329 = vmatpush1.bf16.msra.mxu0 %v1284
    %1330 = vmatprep.subr.bf16.mxu0 0
    %1331 = vmatpush1.bf16.msra.mxu0 %v1285
    %1332 = vmatprep.subr.bf16.mxu0 0
    %1333 = vmatpush1.bf16.msra.mxu0 %v1286
    %1334 = vmatprep.subr.bf16.mxu0 0
    %1335 = vmatpush1.bf16.msra.mxu0 %v1287
    %1336 = vmatprep.mubr.bf16.mxu0 %v1168
    %1337 = vmatmul.mubr.bf16.gmra.mrb[0].mxu0 %v1167
    %v1338 = vpop.f32.mrb[0].mxu0
    %v1339 = vadd.f32 %v1206, %v1338
    %v1340 = vpop.f32.mrb[0].mxu0
    %v1341 = vpop.f32.mrb[0].mxu0
    %v1342 = vadd.f32 %v1206, %v1341
    %v1343 = vpop.f32.mrb[0].mxu0
    %1344 = vdwg.mxu0
    %1345 = vst [vmem:[#allocation10] sm:$0xff] %v1339
    %1346 = vst [vmem:[#allocation10 + $0x8] sm:$0xff] %v1342
    // Predicated region
    $region46: #{tpu_custom_call.1} parent=1 // pred_check
      _
    $region47: #{tpu_custom_call.1} parent=1 // pred_check_branch
      %1348 = sbr.rel (0) target = $region49
    $region48: #{tpu_custom_call.1} parent=1 // pred_region
      %s1350 = ssub.s32 256, 256
      %1351 = vsyncadd [#allocation4], %s1350
      %s1352 = sshll.u32 [#allocation10], 4
      %s1353 = int_to_ptr.vmem [resolvable:$true] %s1352
      %1358 = dma.vmem_to_hbm [thread:$0]  %s1353, 256, %s7, [#allocation4], 128, 128, 8
    $region49: #{tpu_custom_call.1} parent=1 // pred_fallthru
      _
    // Predicated region
    $region50: #{tpu_custom_call.1} parent=1 // pred_check
      _
    $region51: #{tpu_custom_call.1} parent=1 // pred_check_branch
      %1360 = sbr.rel (0) target = $region53
    $region52: #{tpu_custom_call.1} parent=1 // pred_region
      %1361 = dma.done [#allocation4], 256
    $region53: #{tpu_custom_call.1} parent=1 // pred_fallthru
      _
    %1362 = vsyncpa [#allocation3], 1
    %1363 = vsyncpa [#allocation6], 1
    %1364 = vsyncpa [#allocation9], 1
    %1365 = vsyncpa [#allocation4], 1

</llo_original>
